<compile_context>
chip_gen: v7x
topology: tpu7x:2x2x1
jax: 0.10.0
libtpu: 0.0.40
codegen_flags: <defaults>
</compile_context>

<pallas_src>
import numpy as np
import jax
import jax.numpy as jnp
from jax.experimental import pallas as pl
from jax.experimental.pallas import tpu as pltpu


_VMEM_TILE_BUDGET = 24 * 1024 * 1024      # double-buffered (in + out) bytes per pipeline stage
_VMEM_LIMIT_BYTES = 32 * 1024 * 1024      # == v6e/v7x scoped default, < physical VMEM everywhere
_STEP_OVERHEAD_BYTES = 350_000            # ~0.35 us/step pipeline overhead at ~1 TB/s HBM


def _round_up(a, m):
    return ((a + m - 1) // m) * m


def _sublane_granule(*dtypes):
    """Second-to-last block dim must be a multiple of 8/16/32 for 4/2/1-byte dtypes."""
    g = 8
    for dt in dtypes:
        g = max(g, 32 // jnp.dtype(dt).itemsize)
    return g


def _make_fourier_kernel(num_freq, anchor_stride):
    """Frequency bands 2**k are trace-time constants.  sin/cos are evaluated exactly every
    `anchor_stride` octaves (EUP) and advanced by the double-angle recurrence (VPU) in
    between, keeping the transcendental count ~2 per element regardless of F."""

    def kernel(x_ref, out_ref):
        # x_ref: (tr, L)    out_ref: (2F, tr, L)    L lane-dense (multiple of 128)
        x = x_ref[...].astype(jnp.float32)
        s = c = None
        for k in range(num_freq):
            if k % anchor_stride == 0:
                # 2^k * fl(pi) is an exact power-of-two scaling -> bit-matches the reference.
                ang = x * np.float32(np.pi * (2.0 ** k))
                s, c = jnp.sin(ang), jnp.cos(ang)
            else:
                s, c = 2.0 * s * c, 1.0 - 2.0 * (s * s)      # double-angle step on the VPU
            out_ref[k] = s.astype(out_ref.dtype)             # sin(2^k * pi * x)
            out_ref[num_freq + k] = c.astype(out_ref.dtype)  # cos(2^k * pi * x)

    return kernel


def _fourier_reference(x, num_freq, out_dtype=None):
    """Fused XLA reference (also the fast path for tiny / per-column inputs).
    Computes in float32, exactly like the Pallas path, so both paths agree."""
    if out_dtype is None:
        out_dtype = jnp.promote_types(x.dtype, jnp.float32)
    scale = (2.0 ** jnp.arange(num_freq, dtype=jnp.float32)) * np.float32(np.pi)
    scaled = x.astype(jnp.float32) * scale
    return jnp.concatenate([jnp.sin(scaled), jnp.cos(scaled)], axis=-1).astype(out_dtype)


def _choose_tiling(r_raw, granule, tr_cap, per_row_bytes, min_steps):
    """Pick (grid_steps, rows_per_step) minimising padded-row writeback + per-step overhead."""
    g_lo = max(min(min_steps, max(1, r_raw // granule)), pl.cdiv(r_raw, tr_cap))
    g_hi = max(g_lo, min(g_lo + 16, pl.cdiv(r_raw, granule)))
    step_rows = max(1, _STEP_OVERHEAD_BYTES // per_row_bytes)   # one step ~= this many rows of HBM
    best = None
    for g in range(g_lo, g_hi + 1):
        tr = _round_up(pl.cdiv(r_raw, g), granule)
        pad = g * tr - r_raw
        score = pad + g * step_rows
        if best is None or score < best[0]:
            best = (score, g, tr)
    return best[1], best[2]


def fourier_embedding(x, num_frequencies=3, is_time=False, *,
                      channel_major=False, out_dtype=None, lane_width=512,
                      anchor_stride=3, min_grid_steps=8, min_elems_for_pallas=131072):
    """Pallas implementation of FourierEmbedding.forward(x, isTime=is_time).

    channel_major=False (default): returns (..., 2F), identical to the PyTorch module.
    channel_major=True:            returns (2F, ...) with no wrapper transpose (fast path for
                                   feeding a dense layer that contracts over the channel dim).
    """
    num_freq = 3 if is_time else int(num_frequencies)
    if out_dtype is None:
        out_dtype = jnp.promote_types(x.dtype, jnp.float32)
    d = x.shape[-1]

    def _as_channel_major(y):                      # (..., 2F) -> (2F, ...)
        return jnp.moveaxis(y, -1, 0) if channel_major else y

    # Per-column frequency case (last dim == F): rare in this PINN code, keep it in fused XLA.
    # TODO(synk): the lane-dense Pallas path only covers the scalar-coordinate (last dim == 1) case.
    if d != 1:
        assert d == num_freq, "last dim of x must broadcast against the frequency bands"
        return _as_channel_major(_fourier_reference(x, num_freq, out_dtype))

    lead_shape = x.shape[:-1]
    n = int(np.prod(lead_shape, dtype=np.int64)) if lead_shape else 1

    # Small / medium batches: launch + per-step overhead dwarfs the streaming work.
    if n < min_elems_for_pallas:
        return _as_channel_major(_fourier_reference(x, num_freq, out_dtype))

    in_bytes = jnp.dtype(x.dtype).itemsize
    out_bytes = jnp.dtype(out_dtype).itemsize
    granule = _sublane_granule(x.dtype, out_dtype)

    # ---- lane-dense layout: the N samples go on the lane axis as a (rows, L) slab ---------
    L = int(lane_width)
    assert L % 128 == 0 and L >= 128
    while L >= 256 and (L // 2) % 128 == 0 and pl.cdiv(n, L) < granule * min_grid_steps:
        L //= 2                                    # keep enough rows for a multi-step grid

    r_raw = pl.cdiv(n, L)
    per_row_bytes = L * (in_bytes + 2 * num_freq * out_bytes)
    tr_cap = max(granule, (_VMEM_TILE_BUDGET // (2 * per_row_bytes)) // granule * granule)
    g, tr = _choose_tiling(r_raw, granule, tr_cap, per_row_bytes, min_grid_steps)
    rows = g * tr
    n_pad = rows * L

    xf = x.reshape(-1)
    if n_pad != n:
        xf = jnp.pad(xf, (0, n_pad - n))           # padded tail is computed then sliced away
    x2d = xf.reshape(rows, L)

    n_anchor = len([k for k in range(num_freq) if k % anchor_stride == 0])
    cost = pl.CostEstimate(
        flops=n_pad * (2 * n_anchor + 6 * (num_freq - n_anchor) + 2 * num_freq),
        transcendentals=n_pad * 2 * n_anchor,
        bytes_accessed=n_pad * in_bytes + 2 * num_freq * n_pad * out_bytes)

    out = pl.pallas_call(
        _make_fourier_kernel(num_freq, anchor_stride),
        out_shape=jax.ShapeDtypeStruct((2 * num_freq, rows, L), out_dtype),
        grid=(g,),
        in_specs=[pl.BlockSpec((tr, L), lambda i: (i, 0))],
        out_specs=pl.BlockSpec((2 * num_freq, tr, L), lambda i: (0, i, 0)),
        compiler_params=pltpu.CompilerParams(
            dimension_semantics=("parallel",),
            vmem_limit_bytes=_VMEM_LIMIT_BYTES),
        cost_estimate=cost,
    )(x2d)

    out = out.reshape(2 * num_freq, n_pad)         # pure reshape: channel-major (2F, n_pad)
    if channel_major:
        if n_pad != n:
            out = out[:, :n]
        return out.reshape((2 * num_freq,) + lead_shape)

    # PyTorch-compatible (..., 2F): costs one XLA transpose of the output.  Prefer
    # channel_major=True (and contract over dim 0 downstream) to skip it entirely.
    out = out.T
    if n_pad != n:
        out = out[:n]
    return out.reshape(lead_shape + (2 * num_freq,))


if __name__ == "__main__":
    key = jax.random.PRNGKey(0)
    k0, k1, k2 = jax.random.split(key, 3)

    # Batch of scalar spatial coordinates (N, 1).  The Pallas threshold is overridden so the
    # test exercises the kernel at a modest, fast-to-verify size; production calls keep the
    # default (fused XLA below ~1.3e5 elements, where it wins on launch overhead).
    n_big = 32768
    x = jax.random.normal(k0, (n_big, 1), dtype=jnp.float32)
    force = dict(min_elems_for_pallas=1024)

    spatial = jax.jit(lambda v: fourier_embedding(v, num_frequencies=3, **force))
    out = jax.block_until_ready(spatial(x))
    ref = _fourier_reference(x, 3)
    assert out.shape == (n_big, 6) and out.dtype == jnp.float32
    # Double-angle recurrence reassociates the pi multiply -> allow a little extra atol.
    np.testing.assert_allclose(np.asarray(out), np.asarray(ref), rtol=1e-5, atol=5e-5)

    # Channel-major fast-path contract: (2F, N) via pure reshape, no wrapper transpose.
    cmaj = jax.jit(lambda v: fourier_embedding(v, num_frequencies=3, channel_major=True, **force))
    out_cm = jax.block_until_ready(cmaj(x))
    assert out_cm.shape == (6, n_big)
    np.testing.assert_allclose(np.asarray(out_cm), np.asarray(ref).T, rtol=1e-5, atol=5e-5)

    # isTime=True always uses the 3 bands 2**[0,1,2], regardless of num_frequencies.
    temporal = jax.jit(lambda v: fourier_embedding(v, num_frequencies=7, is_time=True, **force))
    out_t = jax.block_until_ready(temporal(x))
    assert out_t.shape == (n_big, 6)
    np.testing.assert_allclose(np.asarray(out_t), np.asarray(ref), rtol=1e-5, atol=5e-5)

    # Wider frequency count (hybrid anchor/recurrence branch) + non-power-of-two N (padding).
    n_odd = 50000
    x_odd = jax.random.normal(k1, (n_odd, 1), dtype=jnp.float32)
    out5 = jax.block_until_ready(
        jax.jit(lambda v: fourier_embedding(v, num_frequencies=5, **force))(x_odd))
    assert out5.shape == (n_odd, 10)
    np.testing.assert_allclose(np.asarray(out5), np.asarray(_fourier_reference(x_odd, 5)),
                               rtol=1e-5, atol=1e-4)

    # bf16 input exercises the 16-row sublane granule; compute stays f32 (torch promotion).
    x_bf = x.astype(jnp.bfloat16)
    out_bf = jax.block_until_ready(
        jax.jit(lambda v: fourier_embedding(v, num_frequencies=3, **force))(x_bf))
    assert out_bf.shape == (n_big, 6) and out_bf.dtype == jnp.float32
    np.testing.assert_allclose(np.asarray(out_bf), np.asarray(_fourier_reference(x_bf, 3)),
                               rtol=1e-5, atol=5e-5)

    # Typical tiny single-batch PINN call takes the fused-XLA fast path (default threshold).
    x_small = jax.random.normal(k2, (128, 1), dtype=jnp.float32)
    out_small = jax.block_until_ready(fourier_embedding(x_small))
    np.testing.assert_allclose(np.asarray(out_small),
                               np.asarray(_fourier_reference(x_small, 3)),
                               rtol=1e-5, atol=1e-5)

    print("KERNEL_OK")
</pallas_src>

<mosaic_0001>
module attributes {stable_mosaic.version = 11 : i64} {
  func.func @kernel(%arg0: i32, %arg1: memref<8x512xf32, #tpu.memory_space<vmem>>, %arg2: memref<6x8x512xf32, #tpu.memory_space<vmem>>) attributes {dimension_semantics = [#tpu.dimension_semantics<parallel>], iteration_bounds = array<i64: 8>, scalar_prefetch = 0 : i64, scratch_operands = 0 : i64, tpu.core_type = #tpu.core_type<tc>, window_params = [{transform_indices = @transform_0, window_bounds = array<i64: 8, 512>}, {transform_indices = @transform_1, window_bounds = array<i64: 6, 8, 512>}]} {
    %c0 = arith.constant 0 : index
    %c0_0 = arith.constant 0 : index
    %0 = vector.load %arg1[%c0, %c0_0] : memref<8x512xf32, #tpu.memory_space<vmem>>, vector<8x512xf32>
    %cst = arith.constant 3.14159274 : f32
    %1 = vector.broadcast %cst : f32 to vector<8x512xf32>
    %2 = arith.mulf %0, %1 : vector<8x512xf32>
    %3 = math.sin %2 : vector<8x512xf32>
    %4 = math.cos %2 : vector<8x512xf32>
    %c0_1 = arith.constant 0 : index
    %c0_2 = arith.constant 0 : index
    %c0_3 = arith.constant 0 : index
    %5 = vector.load %arg2[%c0_1, %c0_2, %c0_3] : memref<6x8x512xf32, #tpu.memory_space<vmem>>, vector<1x8x512xf32>
    %6 = vector.shape_cast %5 : vector<1x8x512xf32> to vector<8x512xf32>
    %7 = vector.shape_cast %3 : vector<8x512xf32> to vector<1x8x512xf32>
    tpu.vector_store %arg2[%c0_1, %c0_2, %c0_3], %7 {strides = array<i32>} : memref<6x8x512xf32, #tpu.memory_space<vmem>>, vector<1x8x512xf32>,
    %c3 = arith.constant 3 : index
    %c0_4 = arith.constant 0 : index
    %c0_5 = arith.constant 0 : index
    %8 = vector.load %arg2[%c3, %c0_4, %c0_5] : memref<6x8x512xf32, #tpu.memory_space<vmem>>, vector<1x8x512xf32>
    %9 = vector.shape_cast %8 : vector<1x8x512xf32> to vector<8x512xf32>
    %10 = vector.shape_cast %4 : vector<8x512xf32> to vector<1x8x512xf32>
    tpu.vector_store %arg2[%c3, %c0_4, %c0_5], %10 {strides = array<i32>} : memref<6x8x512xf32, #tpu.memory_space<vmem>>, vector<1x8x512xf32>,
    %cst_6 = arith.constant 2.000000e+00 : f32
    %11 = vector.broadcast %cst_6 : f32 to vector<8x512xf32>
    %12 = arith.mulf %11, %3 : vector<8x512xf32>
    %13 = arith.mulf %12, %4 : vector<8x512xf32>
    %14 = arith.mulf %3, %3 : vector<8x512xf32>
    %cst_7 = arith.constant 2.000000e+00 : f32
    %15 = vector.broadcast %cst_7 : f32 to vector<8x512xf32>
    %16 = arith.mulf %15, %14 : vector<8x512xf32>
    %cst_8 = arith.constant 1.000000e+00 : f32
    %17 = vector.broadcast %cst_8 : f32 to vector<8x512xf32>
    %18 = arith.subf %17, %16 : vector<8x512xf32>
    %c1 = arith.constant 1 : index
    %c0_9 = arith.constant 0 : index
    %c0_10 = arith.constant 0 : index
    %19 = vector.load %arg2[%c1, %c0_9, %c0_10] : memref<6x8x512xf32, #tpu.memory_space<vmem>>, vector<1x8x512xf32>
    %20 = vector.shape_cast %19 : vector<1x8x512xf32> to vector<8x512xf32>
    %21 = vector.shape_cast %13 : vector<8x512xf32> to vector<1x8x512xf32>
    tpu.vector_store %arg2[%c1, %c0_9, %c0_10], %21 {strides = array<i32>} : memref<6x8x512xf32, #tpu.memory_space<vmem>>, vector<1x8x512xf32>,
    %c4 = arith.constant 4 : index
    %c0_11 = arith.constant 0 : index
    %c0_12 = arith.constant 0 : index
    %22 = vector.load %arg2[%c4, %c0_11, %c0_12] : memref<6x8x512xf32, #tpu.memory_space<vmem>>, vector<1x8x512xf32>
    %23 = vector.shape_cast %22 : vector<1x8x512xf32> to vector<8x512xf32>
    %24 = vector.shape_cast %18 : vector<8x512xf32> to vector<1x8x512xf32>
    tpu.vector_store %arg2[%c4, %c0_11, %c0_12], %24 {strides = array<i32>} : memref<6x8x512xf32, #tpu.memory_space<vmem>>, vector<1x8x512xf32>,
    %cst_13 = arith.constant 2.000000e+00 : f32
    %25 = vector.broadcast %cst_13 : f32 to vector<8x512xf32>
    %26 = arith.mulf %25, %13 : vector<8x512xf32>
    %27 = arith.mulf %26, %18 : vector<8x512xf32>
    %28 = arith.mulf %13, %13 : vector<8x512xf32>
    %cst_14 = arith.constant 2.000000e+00 : f32
    %29 = vector.broadcast %cst_14 : f32 to vector<8x512xf32>
    %30 = arith.mulf %29, %28 : vector<8x512xf32>
    %cst_15 = arith.constant 1.000000e+00 : f32
    %31 = vector.broadcast %cst_15 : f32 to vector<8x512xf32>
    %32 = arith.subf %31, %30 : vector<8x512xf32>
    %c2 = arith.constant 2 : index
    %c0_16 = arith.constant 0 : index
    %c0_17 = arith.constant 0 : index
    %33 = vector.load %arg2[%c2, %c0_16, %c0_17] : memref<6x8x512xf32, #tpu.memory_space<vmem>>, vector<1x8x512xf32>
    %34 = vector.shape_cast %33 : vector<1x8x512xf32> to vector<8x512xf32>
    %35 = vector.shape_cast %27 : vector<8x512xf32> to vector<1x8x512xf32>
    tpu.vector_store %arg2[%c2, %c0_16, %c0_17], %35 {strides = array<i32>} : memref<6x8x512xf32, #tpu.memory_space<vmem>>, vector<1x8x512xf32>,
    %c5 = arith.constant 5 : index
    %c0_18 = arith.constant 0 : index
    %c0_19 = arith.constant 0 : index
    %36 = vector.load %arg2[%c5, %c0_18, %c0_19] : memref<6x8x512xf32, #tpu.memory_space<vmem>>, vector<1x8x512xf32>
    %37 = vector.shape_cast %36 : vector<1x8x512xf32> to vector<8x512xf32>
    %38 = vector.shape_cast %32 : vector<8x512xf32> to vector<1x8x512xf32>
    tpu.vector_store %arg2[%c5, %c0_18, %c0_19], %38 {strides = array<i32>} : memref<6x8x512xf32, #tpu.memory_space<vmem>>, vector<1x8x512xf32>,
    return
  }
  func.func @transform_0(%arg0: i32) -> (i32, i32) {
    %c0_i32 = arith.constant 0 : i32
    %c0_i32_0 = arith.constant 0 : i32
    return %arg0, %c0_i32 : i32, i32
  }
  func.func @transform_1(%arg0: i32) -> (i32, i32, i32) {
    %c0_i32 = arith.constant 0 : i32
    %c0_i32_0 = arith.constant 0 : i32
    %c0_i32_1 = arith.constant 0 : i32
    return %c0_i32, %arg0, %c0_i32_0 : i32, i32, i32
  }
}

</mosaic_0001>

<llo_original>
// kernel: _lambda_.1
$region0: #{_lambda_.1}
  #allocation0 [shape = 'u32[]', space=smem, size = 0x4, offset = 0x4, fixed_abs, tag = 'smem constant byte address 0x4 - core index']
  #allocation1 [shape = 'u32[144,128]{1,0:T(1,128)}', space=vmem, size = 0x12000, scoped, tag = 'internal scratch']
  %s0 = inlined_call_operand.vmem [shape: f32[64,512], index: 0, kind: input, shape index: {}]
  %s1 = inlined_call_operand.vmem [shape: f32[6,64,512], index: 1, kind: output, shape index: {}]
  %s2 = sld [smem:[#allocation0]]
  $region56: #{_lambda_.1} parent=0
    _
  %s4 = ssub.s32 1, %s2
  %s5 = scalar_select 0, %s4, %s2
  $region1: #{_lambda_.1} parent=0
    #allocation2 [shape = 'u8[196608]{0}', space=vmem, size = 0x30000, scoped, tag = 'output window, operand 0']
    loop: start=0, step=1, limit=10
    $region2: #{_lambda_.1} parent=1 // loop_pre_header
      _
    $region3: #{_lambda_.1} parent=1 // loop_header
      %s7 = sphi 0, %s11
      %p8 = scmp.ge.s32.totalorder %s7, 10
      %s17 = sphi 0, %s19
      %s20 = sphi 0, %s17
      %s21 = sphi 0, %s20
      %s37 = sphi 0, %s21
      %s43 = sphi 0, %s45
      %s46 = sphi 0, %s43
      %s47 = sphi 0, %s46
      %s63 = sphi 0, %s47
    $region4: #{_lambda_.1} parent=1 // loop_header_branch
      %10 = sbr.rel (%p8) target = $region8
    $region5: #{_lambda_.1} parent=1 // loop_body
      %s12 = ssub.s32 %s7, 1
      %s13 = ssub.s32 %s7, 2
      %s14 = sadd.s32 %s7, 1
      %s15 = ssub.s32 %s7, %s14
      %p16 = scmp.eq.s32.totalorder %s15, 0
      %s18 = sadd.s32 %s17, 1
      %s19 = scalar_select %p16, %s17, %s18
      %p22 = pneg %p16
      %p23 = scmp.eq.s32.totalorder %s7, 7
      %p24 = por %p22, %p23
      %p25 = scmp.ne.s32.totalorder %s17, %s20
      %p26 = scmp.eq.s32.totalorder %s7, 0
      %p27 = por %p25, %p26
      %p28 = scmp.ne.s32.totalorder %s17, %s20
      %p29 = scmp.eq.s32.totalorder %s12, 7
      %p30 = por %p28, %p29
      %p31 = scmp.ne.s32.totalorder %s20, %s21
      %p32 = scmp.eq.s32.totalorder %s12, 0
      %p33 = por %p31, %p32
      %p34 = scmp.ne.s32.totalorder %s20, %s21
      %p35 = scmp.eq.s32.totalorder %s13, 7
      %p36 = por %p34, %p35
      %p38 = scmp.ne.s32.totalorder %s21, %s37
      %p39 = scmp.eq.s32.totalorder %s13, 0
      %p40 = por %p38, %p39
      %s41 = ssub.s32 %s7, %s14
      %p42 = scmp.eq.s32.totalorder %s41, 0
      %s44 = sadd.s32 %s43, 1
      %s45 = scalar_select %p42, %s43, %s44
      %p48 = pneg %p42
      %p49 = scmp.eq.s32.totalorder %s7, 7
      %p50 = por %p48, %p49
      %p51 = scmp.ne.s32.totalorder %s43, %s46
      %p52 = scmp.eq.s32.totalorder %s7, 0
      %p53 = por %p51, %p52
      %p54 = scmp.ne.s32.totalorder %s43, %s46
      %p55 = scmp.eq.s32.totalorder %s12, 7
      %p56 = por %p54, %p55
      %p57 = scmp.ne.s32.totalorder %s46, %s47
      %p58 = scmp.eq.s32.totalorder %s12, 0
      %p59 = por %p57, %p58
      %p60 = scmp.ne.s32.totalorder %s46, %s47
      %p61 = scmp.eq.s32.totalorder %s13, 7
      %p62 = por %p60, %p61
      %p64 = scmp.ne.s32.totalorder %s47, %s63
      %p65 = scmp.eq.s32.totalorder %s13, 0
      %p66 = por %p64, %p65
      %p67 = scmp.le.s32.totalorder 1, %s7
      %p68 = scmp.lt.s32.totalorder %s7, 9
      %p69 = pnand %p67, %p68
      %p70 = pneg %p69
      // Predicated region
      $region9: #{_lambda_.1} parent=5 // pred_check
        _
      $region10: #{_lambda_.1} parent=5 // pred_check_branch
        %72 = sbr.rel (%p69) target = $region12
      $region11: #{_lambda_.1} parent=5 // pred_region
        %s73 = ssub.s32 %s7, 1
      $region12: #{_lambda_.1} parent=5 // pred_fallthru
        _
      %p74 = scmp.lt.s32.totalorder %s7, 8
      // Predicated region
      $region13: #{_lambda_.1} parent=5 // pred_check
        %p75 = pneg %p74
      $region14: #{_lambda_.1} parent=5 // pred_check_branch
        %77 = sbr.rel (%p75) target = $region16
      $region15: #{_lambda_.1} parent=5 // pred_region
        // Predicated region
        $region17: #{_lambda_.1} parent=15 // pred_check
          %p78 = pneg %p27
        $region18: #{_lambda_.1} parent=15 // pred_check_branch
          %80 = sbr.rel (%p78) target = $region20
        $region19: #{_lambda_.1} parent=15 // pred_region
          %p81 = scmp.lt.s32.totalorder %s7, 7
          %s82 = scalar_select %p81, %s7, 7
          %s83 = smul.addr %s82, 4
          %s84 = smul.addr %s83, 8
          %s85 = scalar_lea.vmem %s0, %s84
        $region20: #{_lambda_.1} parent=15 // pred_fallthru
          _
      $region16: #{_lambda_.1} parent=5 // pred_fallthru
        _
      %p86 = scmp.le.s32.totalorder 1, %s7
      %p87 = scmp.lt.s32.totalorder %s7, 9
      %p88 = pnand %p86, %p87
      %p89 = pneg %p88
      // Predicated region
      $region21: #{_lambda_.1} parent=5 // pred_check
        _
      $region22: #{_lambda_.1} parent=5 // pred_check_branch
        %91 = sbr.rel (%p88) target = $region24
      $region23: #{_lambda_.1} parent=5 // pred_region
        %s92 = ssub.s32 %s7, 1
        %p93 = scmp.lt.s32.totalorder %s12, 7
        %s94 = scalar_select %p93, %s12, 7
        %s95 = smul.addr %s94, 4
        %s96 = smul.addr %s95, 8
        %s97 = scalar_lea.vmem %s0, %s96
        %p98 = pneg %p33
        %p99 = pneg %p30
        %p100 = pneg %p59
        %p101 = pneg %p56
        %s102 = sand.u32 %s46, 1
        %s103 = sand.u32 %s46, 1
        %s104 = smul.addr %s103, 192
        %s105 = scalar_lea.vmem [#allocation2], %s104
        %p106 = scmp.lt.s32.totalorder %s12, 7
        %s107 = scalar_select %p106, %s12, 7
        %s108 = smul.addr %s107, 4
        %s109 = smul.addr %s108, 8
        %s110 = scalar_lea.vmem %s0, %s109
        %v111 = vld [vmem:[%s110] sm:$0xff]
        %v112 = vld [vmem:[%s110 + $0x8] sm:$0xff]
        %v113 = vld [vmem:[%s110 + $0x10] sm:$0xff]
        %v114 = vld [vmem:[%s110 + $0x18] sm:$0xff]
        %v115 = vmul.f32 %v111, 3.1415927
        %v116 = vmul.f32 %v112, 3.1415927
        %v117 = vmul.f32 %v113, 3.1415927
        %v118 = vmul.f32 %v114, 3.1415927
        %v119 = vand.u32 2147483647, %v115
        %vm120 = vcmp.le.f32.partialorder %v119, 0.7853982
        %vm121 = vcmp.lt.s32.totalorder %v115, 0
        %v122 = vand.u32 %v115, 2139095040
        %v123 = vshrl.u32 %v122, 23
        %v124 = vsub.s32 %v123, 127
        %v125 = vand.u32 2147483647, %v115
        %v126 = vand.u32 %v125, 8388607
        %v127 = vor.u32 %v126, 8388608
        %v128 = vsub.s32 0, %v127
        %v129 = vadd.s32 %v124, 1
        %vm130 = vcmp.gt.s32.totalorder %v129, 0
        %v131 = vsel %vm130, %v129, 0
        %v132 = vshrl.u32 %v131, 5
        %v133 = vand.u32 %v131, 31
        %v134 = vsub.s32 32, %v133
        %v135 = vshrl.u32 683565275, %v134
        %v136 = vshll.u32 683565275, %v133
        %v137 = vshrl.u32 2475754826, %v134
        %v138 = vor.u32 %v136, %v137
        %v139 = vshll.u32 2475754826, %v133
        %v140 = vshrl.u32 2131351028, %v134
        %v141 = vor.u32 %v139, %v140
        %v142 = vshll.u32 2131351028, %v133
        %v143 = vshrl.u32 2102212464, %v134
        %v144 = vor.u32 %v142, %v143
        %v145 = vshll.u32 2102212464, %v133
        %v146 = vshrl.u32 920167782, %v134
        %v147 = vor.u32 %v145, %v146
        %v148 = vshll.u32 920167782, %v133
        %v149 = vshrl.u32 1326507024, %v134
        %v150 = vor.u32 %v148, %v149
        %vm151 = vcmp.lt.s32.totalorder %v132, 1
        %vm152 = vcmp.lt.s32.totalorder %v132, 2
        %vm153 = vcmp.lt.s32.totalorder %v132, 3
        %vm154 = vcmp.lt.s32.totalorder %v132, 4
        %v155 = vsel %vm151, %v135, %v138
        %v156 = vsel %vm154, %v144, 2102212464
        %v157 = vsel %vm153, %v141, %v156
        %v158 = vsel %vm152, %v155, %v157
        %v159 = vsel %vm151, %v138, %v141
        %v160 = vsel %vm154, %v147, 920167782
        %v161 = vsel %vm153, %v144, %v160
        %v162 = vsel %vm152, %v159, %v161
        %v163 = vsel %vm151, %v141, %v144
        %v164 = vsel %vm154, %v150, 1326507024
        %v165 = vsel %vm153, %v147, %v164
        %v166 = vsel %vm152, %v163, %v165
        %v167 = vshll.u32 %v127, 8
        %v168 = vmul.u32.u64.compose %v167, %v166
        %v169 = vextract.low.u32 %v168
        %v170 = vextract.high.u32 %v168
        %v171 = vmul.u32.u64.compose %v167, %v162
        %v172 = vextract.low.u32 %v171
        %v173 = vextract.high.u32 %v171
        %v174 = vmul.u32 %v167, %v158
        %v175 = vadd.s32 %v170, %v172
        %vm176 = vc.u32 %v170, %v172
        %v177 = vadd.s32 %v173, 1
        %v178 = vsel %vm176, %v177, %v173
        %v179 = vadd.s32 %v174, %v178
        %v180 = vadd.s32 %v179, 536870912
        %v181 = vshrl.u32 %v180, 30
        %v182 = vshll.u32 %v181, 30
        %v183 = vsub.s32 %v179, %v182
        %vm184 = vcmp.lt.s32.totalorder %v183, 0
        %v185 = vsub.s32 0, %v183
        %v186 = vsel %vm184, %v185, %v183
        %v187 = vclz %v186
        %v188 = vsub.s32 %v187, 2
        %vm189 = vcmp.gt.s32.totalorder 0, %v188
        %v190 = vsel %vm189, 0, %v188
        %v191 = vsub.s32 32, %v190
        %v192 = vshll.u32 %v183, %v190
        %v193 = vshrl.u32 %v175, %v191
        %v194 = vor.u32 %v192, %v193
        %v195 = vsub.s32 4294967266, %v190
        %v196 = vadd.s32 %v195, 127
        %v197 = vshll.u32 %v196, 23
        %v198 = vor.u32 4788187, %v197
        %v199 = vand.u32 2147483647, %v198
        %v201 = vcvt.s32.f32 %v194
        %v202 = vmul.f32 %v201, %v199
        %v203 = vxor.u32 %v202, 2147483648
        %v204 = vsel %vm121, %v203, %v202
        %v205 = vsub.s32 4, %v181
        %v206 = vsel %vm121, %v205, %v181
        %v207 = vsel %vm120, %v115, %v204
        %v208 = vsel %vm120, 0, %v206
        %v209 = vcosq.f32.pop %v207
        %v210 = vsinq.f32.pop %v207
        %vm211 = vweird.f32 %v115
        %v212 = vadd.s32 %v208, 3
        %v213 = vand.u32 %v212, 3
        %vm214 = vcmp.lt.s32.totalorder %v213, 2
        %vm215 = vcmp.eq.s32.totalorder %v213, 0
        %v216 = vxor.u32 %v210, 2147483648
        %v217 = vsel %vm215, %v209, %v216
        %vm218 = vcmp.eq.s32.totalorder %v213, 2
        %v219 = vxor.u32 %v209, 2147483648
        %v220 = vsel %vm218, %v219, %v210
        %v221 = vsel %vm214, %v217, %v220
        %v222 = vsel %vm211, nan, %v221
        %v223 = vand.u32 2147483647, %v116
        %vm224 = vcmp.le.f32.partialorder %v223, 0.7853982
        %vm225 = vcmp.lt.s32.totalorder %v116, 0
        %v226 = vand.u32 %v116, 2139095040
        %v227 = vshrl.u32 %v226, 23
        %v228 = vsub.s32 %v227, 127
        %v229 = vand.u32 2147483647, %v116
        %v230 = vand.u32 %v229, 8388607
        %v231 = vor.u32 %v230, 8388608
        %v232 = vsub.s32 0, %v231
        %v233 = vadd.s32 %v228, 1
        %vm234 = vcmp.gt.s32.totalorder %v233, 0
        %v235 = vsel %vm234, %v233, 0
        %v236 = vshrl.u32 %v235, 5
        %v237 = vand.u32 %v235, 31
        %v238 = vsub.s32 32, %v237
        %v239 = vshrl.u32 683565275, %v238
        %v240 = vshll.u32 683565275, %v237
        %v241 = vshrl.u32 2475754826, %v238
        %v242 = vor.u32 %v240, %v241
        %v243 = vshll.u32 2475754826, %v237
        %v244 = vshrl.u32 2131351028, %v238
        %v245 = vor.u32 %v243, %v244
        %v246 = vshll.u32 2131351028, %v237
        %v247 = vshrl.u32 2102212464, %v238
        %v248 = vor.u32 %v246, %v247
        %v249 = vshll.u32 2102212464, %v237
        %v250 = vshrl.u32 920167782, %v238
        %v251 = vor.u32 %v249, %v250
        %v252 = vshll.u32 920167782, %v237
        %v253 = vshrl.u32 1326507024, %v238
        %v254 = vor.u32 %v252, %v253
        %vm255 = vcmp.lt.s32.totalorder %v236, 1
        %vm256 = vcmp.lt.s32.totalorder %v236, 2
        %vm257 = vcmp.lt.s32.totalorder %v236, 3
        %vm258 = vcmp.lt.s32.totalorder %v236, 4
        %v259 = vsel %vm255, %v239, %v242
        %v260 = vsel %vm258, %v248, 2102212464
        %v261 = vsel %vm257, %v245, %v260
        %v262 = vsel %vm256, %v259, %v261
        %v263 = vsel %vm255, %v242, %v245
        %v264 = vsel %vm258, %v251, 920167782
        %v265 = vsel %vm257, %v248, %v264
        %v266 = vsel %vm256, %v263, %v265
        %v267 = vsel %vm255, %v245, %v248
        %v268 = vsel %vm258, %v254, 1326507024
        %v269 = vsel %vm257, %v251, %v268
        %v270 = vsel %vm256, %v267, %v269
        %v271 = vshll.u32 %v231, 8
        %v272 = vmul.u32.u64.compose %v271, %v270
        %v273 = vextract.low.u32 %v272
        %v274 = vextract.high.u32 %v272
        %v275 = vmul.u32.u64.compose %v271, %v266
        %v276 = vextract.low.u32 %v275
        %v277 = vextract.high.u32 %v275
        %v278 = vmul.u32 %v271, %v262
        %v279 = vadd.s32 %v274, %v276
        %vm280 = vc.u32 %v274, %v276
        %v281 = vadd.s32 %v277, 1
        %v282 = vsel %vm280, %v281, %v277
        %v283 = vadd.s32 %v278, %v282
        %v284 = vadd.s32 %v283, 536870912
        %v285 = vshrl.u32 %v284, 30
        %v286 = vshll.u32 %v285, 30
        %v287 = vsub.s32 %v283, %v286
        %vm288 = vcmp.lt.s32.totalorder %v287, 0
        %v289 = vsub.s32 0, %v287
        %v290 = vsel %vm288, %v289, %v287
        %v291 = vclz %v290
        %v292 = vsub.s32 %v291, 2
        %vm293 = vcmp.gt.s32.totalorder 0, %v292
        %v294 = vsel %vm293, 0, %v292
        %v295 = vsub.s32 32, %v294
        %v296 = vshll.u32 %v287, %v294
        %v297 = vshrl.u32 %v279, %v295
        %v298 = vor.u32 %v296, %v297
        %v299 = vsub.s32 4294967266, %v294
        %v300 = vadd.s32 %v299, 127
        %v301 = vshll.u32 %v300, 23
        %v302 = vor.u32 4788187, %v301
        %v303 = vand.u32 2147483647, %v302
        %v305 = vcvt.s32.f32 %v298
        %v306 = vmul.f32 %v305, %v303
        %v307 = vxor.u32 %v306, 2147483648
        %v308 = vsel %vm225, %v307, %v306
        %v309 = vsub.s32 4, %v285
        %v310 = vsel %vm225, %v309, %v285
        %v311 = vsel %vm224, %v116, %v308
        %v312 = vsel %vm224, 0, %v310
        %v313 = vcosq.f32.pop %v311
        %v314 = vsinq.f32.pop %v311
        %vm315 = vweird.f32 %v116
        %v316 = vadd.s32 %v312, 3
        %v317 = vand.u32 %v316, 3
        %vm318 = vcmp.lt.s32.totalorder %v317, 2
        %vm319 = vcmp.eq.s32.totalorder %v317, 0
        %v320 = vxor.u32 %v314, 2147483648
        %v321 = vsel %vm319, %v313, %v320
        %vm322 = vcmp.eq.s32.totalorder %v317, 2
        %v323 = vxor.u32 %v313, 2147483648
        %v324 = vsel %vm322, %v323, %v314
        %v325 = vsel %vm318, %v321, %v324
        %v326 = vsel %vm315, nan, %v325
        %v327 = vand.u32 2147483647, %v117
        %vm328 = vcmp.le.f32.partialorder %v327, 0.7853982
        %vm329 = vcmp.lt.s32.totalorder %v117, 0
        %v330 = vand.u32 %v117, 2139095040
        %v331 = vshrl.u32 %v330, 23
        %v332 = vsub.s32 %v331, 127
        %v333 = vand.u32 2147483647, %v117
        %v334 = vand.u32 %v333, 8388607
        %v335 = vor.u32 %v334, 8388608
        %v336 = vsub.s32 0, %v335
        %v337 = vadd.s32 %v332, 1
        %vm338 = vcmp.gt.s32.totalorder %v337, 0
        %v339 = vsel %vm338, %v337, 0
        %v340 = vshrl.u32 %v339, 5
        %v341 = vand.u32 %v339, 31
        %v342 = vsub.s32 32, %v341
        %v343 = vshrl.u32 683565275, %v342
        %v344 = vshll.u32 683565275, %v341
        %v345 = vshrl.u32 2475754826, %v342
        %v346 = vor.u32 %v344, %v345
        %v347 = vshll.u32 2475754826, %v341
        %v348 = vshrl.u32 2131351028, %v342
        %v349 = vor.u32 %v347, %v348
        %v350 = vshll.u32 2131351028, %v341
        %v351 = vshrl.u32 2102212464, %v342
        %v352 = vor.u32 %v350, %v351
        %v353 = vshll.u32 2102212464, %v341
        %v354 = vshrl.u32 920167782, %v342
        %v355 = vor.u32 %v353, %v354
        %v356 = vshll.u32 920167782, %v341
        %v357 = vshrl.u32 1326507024, %v342
        %v358 = vor.u32 %v356, %v357
        %vm359 = vcmp.lt.s32.totalorder %v340, 1
        %vm360 = vcmp.lt.s32.totalorder %v340, 2
        %vm361 = vcmp.lt.s32.totalorder %v340, 3
        %vm362 = vcmp.lt.s32.totalorder %v340, 4
        %v363 = vsel %vm359, %v343, %v346
        %v364 = vsel %vm362, %v352, 2102212464
        %v365 = vsel %vm361, %v349, %v364
        %v366 = vsel %vm360, %v363, %v365
        %v367 = vsel %vm359, %v346, %v349
        %v368 = vsel %vm362, %v355, 920167782
        %v369 = vsel %vm361, %v352, %v368
        %v370 = vsel %vm360, %v367, %v369
        %v371 = vsel %vm359, %v349, %v352
        %v372 = vsel %vm362, %v358, 1326507024
        %v373 = vsel %vm361, %v355, %v372
        %v374 = vsel %vm360, %v371, %v373
        %v375 = vshll.u32 %v335, 8
        %v376 = vmul.u32.u64.compose %v375, %v374
        %v377 = vextract.low.u32 %v376
        %v378 = vextract.high.u32 %v376
        %v379 = vmul.u32.u64.compose %v375, %v370
        %v380 = vextract.low.u32 %v379
        %v381 = vextract.high.u32 %v379
        %v382 = vmul.u32 %v375, %v366
        %v383 = vadd.s32 %v378, %v380
        %vm384 = vc.u32 %v378, %v380
        %v385 = vadd.s32 %v381, 1
        %v386 = vsel %vm384, %v385, %v381
        %v387 = vadd.s32 %v382, %v386
        %v388 = vadd.s32 %v387, 536870912
        %v389 = vshrl.u32 %v388, 30
        %v390 = vshll.u32 %v389, 30
        %v391 = vsub.s32 %v387, %v390
        %vm392 = vcmp.lt.s32.totalorder %v391, 0
        %v393 = vsub.s32 0, %v391
        %v394 = vsel %vm392, %v393, %v391
        %v395 = vclz %v394
        %v396 = vsub.s32 %v395, 2
        %vm397 = vcmp.gt.s32.totalorder 0, %v396
        %v398 = vsel %vm397, 0, %v396
        %v399 = vsub.s32 32, %v398
        %v400 = vshll.u32 %v391, %v398
        %v401 = vshrl.u32 %v383, %v399
        %v402 = vor.u32 %v400, %v401
        %v403 = vsub.s32 4294967266, %v398
        %v404 = vadd.s32 %v403, 127
        %v405 = vshll.u32 %v404, 23
        %v406 = vor.u32 4788187, %v405
        %v407 = vand.u32 2147483647, %v406
        %v409 = vcvt.s32.f32 %v402
        %v410 = vmul.f32 %v409, %v407
        %v411 = vxor.u32 %v410, 2147483648
        %v412 = vsel %vm329, %v411, %v410
        %v413 = vsub.s32 4, %v389
        %v414 = vsel %vm329, %v413, %v389
        %v415 = vsel %vm328, %v117, %v412
        %v416 = vsel %vm328, 0, %v414
        %v417 = vcosq.f32.pop %v415
        %v418 = vsinq.f32.pop %v415
        %vm419 = vweird.f32 %v117
        %v420 = vadd.s32 %v416, 3
        %v421 = vand.u32 %v420, 3
        %vm422 = vcmp.lt.s32.totalorder %v421, 2
        %vm423 = vcmp.eq.s32.totalorder %v421, 0
        %v424 = vxor.u32 %v418, 2147483648
        %v425 = vsel %vm423, %v417, %v424
        %vm426 = vcmp.eq.s32.totalorder %v421, 2
        %v427 = vxor.u32 %v417, 2147483648
        %v428 = vsel %vm426, %v427, %v418
        %v429 = vsel %vm422, %v425, %v428
        %v430 = vsel %vm419, nan, %v429
        %v431 = vand.u32 2147483647, %v118
        %vm432 = vcmp.le.f32.partialorder %v431, 0.7853982
        %vm433 = vcmp.lt.s32.totalorder %v118, 0
        %v434 = vand.u32 %v118, 2139095040
        %v435 = vshrl.u32 %v434, 23
        %v436 = vsub.s32 %v435, 127
        %v437 = vand.u32 2147483647, %v118
        %v438 = vand.u32 %v437, 8388607
        %v439 = vor.u32 %v438, 8388608
        %v440 = vsub.s32 0, %v439
        %v441 = vadd.s32 %v436, 1
        %vm442 = vcmp.gt.s32.totalorder %v441, 0
        %v443 = vsel %vm442, %v441, 0
        %v444 = vshrl.u32 %v443, 5
        %v445 = vand.u32 %v443, 31
        %v446 = vsub.s32 32, %v445
        %v447 = vshrl.u32 683565275, %v446
        %v448 = vshll.u32 683565275, %v445
        %v449 = vshrl.u32 2475754826, %v446
        %v450 = vor.u32 %v448, %v449
        %v451 = vshll.u32 2475754826, %v445
        %v452 = vshrl.u32 2131351028, %v446
        %v453 = vor.u32 %v451, %v452
        %v454 = vshll.u32 2131351028, %v445
        %v455 = vshrl.u32 2102212464, %v446
        %v456 = vor.u32 %v454, %v455
        %v457 = vshll.u32 2102212464, %v445
        %v458 = vshrl.u32 920167782, %v446
        %v459 = vor.u32 %v457, %v458
        %v460 = vshll.u32 920167782, %v445
        %v461 = vshrl.u32 1326507024, %v446
        %v462 = vor.u32 %v460, %v461
        %vm463 = vcmp.lt.s32.totalorder %v444, 1
        %vm464 = vcmp.lt.s32.totalorder %v444, 2
        %vm465 = vcmp.lt.s32.totalorder %v444, 3
        %vm466 = vcmp.lt.s32.totalorder %v444, 4
        %v467 = vsel %vm463, %v447, %v450
        %v468 = vsel %vm466, %v456, 2102212464
        %v469 = vsel %vm465, %v453, %v468
        %v470 = vsel %vm464, %v467, %v469
        %v471 = vsel %vm463, %v450, %v453
        %v472 = vsel %vm466, %v459, 920167782
        %v473 = vsel %vm465, %v456, %v472
        %v474 = vsel %vm464, %v471, %v473
        %v475 = vsel %vm463, %v453, %v456
        %v476 = vsel %vm466, %v462, 1326507024
        %v477 = vsel %vm465, %v459, %v476
        %v478 = vsel %vm464, %v475, %v477
        %v479 = vshll.u32 %v439, 8
        %v480 = vmul.u32.u64.compose %v479, %v478
        %v481 = vextract.low.u32 %v480
        %v482 = vextract.high.u32 %v480
        %v483 = vmul.u32.u64.compose %v479, %v474
        %v484 = vextract.low.u32 %v483
        %v485 = vextract.high.u32 %v483
        %v486 = vmul.u32 %v479, %v470
        %v487 = vadd.s32 %v482, %v484
        %vm488 = vc.u32 %v482, %v484
        %v489 = vadd.s32 %v485, 1
        %v490 = vsel %vm488, %v489, %v485
        %v491 = vadd.s32 %v486, %v490
        %v492 = vadd.s32 %v491, 536870912
        %v493 = vshrl.u32 %v492, 30
        %v494 = vshll.u32 %v493, 30
        %v495 = vsub.s32 %v491, %v494
        %vm496 = vcmp.lt.s32.totalorder %v495, 0
        %v497 = vsub.s32 0, %v495
        %v498 = vsel %vm496, %v497, %v495
        %v499 = vclz %v498
        %v500 = vsub.s32 %v499, 2
        %vm501 = vcmp.gt.s32.totalorder 0, %v500
        %v502 = vsel %vm501, 0, %v500
        %v503 = vsub.s32 32, %v502
        %v504 = vshll.u32 %v495, %v502
        %v505 = vshrl.u32 %v487, %v503
        %v506 = vor.u32 %v504, %v505
        %v507 = vsub.s32 4294967266, %v502
        %v508 = vadd.s32 %v507, 127
        %v509 = vshll.u32 %v508, 23
        %v510 = vor.u32 4788187, %v509
        %v511 = vand.u32 2147483647, %v510
        %v513 = vcvt.s32.f32 %v506
        %v514 = vmul.f32 %v513, %v511
        %v515 = vxor.u32 %v514, 2147483648
        %v516 = vsel %vm433, %v515, %v514
        %v517 = vsub.s32 4, %v493
        %v518 = vsel %vm433, %v517, %v493
        %v519 = vsel %vm432, %v118, %v516
        %v520 = vsel %vm432, 0, %v518
        %v521 = vcosq.f32.pop %v519
        %v522 = vsinq.f32.pop %v519
        %vm523 = vweird.f32 %v118
        %v524 = vadd.s32 %v520, 3
        %v525 = vand.u32 %v524, 3
        %vm526 = vcmp.lt.s32.totalorder %v525, 2
        %vm527 = vcmp.eq.s32.totalorder %v525, 0
        %v528 = vxor.u32 %v522, 2147483648
        %v529 = vsel %vm527, %v521, %v528
        %vm530 = vcmp.eq.s32.totalorder %v525, 2
        %v531 = vxor.u32 %v521, 2147483648
        %v532 = vsel %vm530, %v531, %v522
        %v533 = vsel %vm526, %v529, %v532
        %v534 = vsel %vm523, nan, %v533
        %v535 = vand.u32 2147483647, %v115
        %vm536 = vcmp.le.f32.partialorder %v535, 0.7853982
        %vm537 = vcmp.lt.s32.totalorder %v115, 0
        %v538 = vand.u32 %v115, 2139095040
        %v539 = vshrl.u32 %v538, 23
        %v540 = vsub.s32 %v539, 127
        %v541 = vand.u32 2147483647, %v115
        %v542 = vand.u32 %v541, 8388607
        %v543 = vor.u32 %v542, 8388608
        %v544 = vsub.s32 0, %v543
        %v545 = vadd.s32 %v540, 1
        %vm546 = vcmp.gt.s32.totalorder %v545, 0
        %v547 = vsel %vm546, %v545, 0
        %v548 = vshrl.u32 %v547, 5
        %v549 = vand.u32 %v547, 31
        %v550 = vsub.s32 32, %v549
        %v551 = vshrl.u32 683565275, %v550
        %v552 = vshll.u32 683565275, %v549
        %v553 = vshrl.u32 2475754826, %v550
        %v554 = vor.u32 %v552, %v553
        %v555 = vshll.u32 2475754826, %v549
        %v556 = vshrl.u32 2131351028, %v550
        %v557 = vor.u32 %v555, %v556
        %v558 = vshll.u32 2131351028, %v549
        %v559 = vshrl.u32 2102212464, %v550
        %v560 = vor.u32 %v558, %v559
        %v561 = vshll.u32 2102212464, %v549
        %v562 = vshrl.u32 920167782, %v550
        %v563 = vor.u32 %v561, %v562
        %v564 = vshll.u32 920167782, %v549
        %v565 = vshrl.u32 1326507024, %v550
        %v566 = vor.u32 %v564, %v565
        %vm567 = vcmp.lt.s32.totalorder %v548, 1
        %vm568 = vcmp.lt.s32.totalorder %v548, 2
        %vm569 = vcmp.lt.s32.totalorder %v548, 3
        %vm570 = vcmp.lt.s32.totalorder %v548, 4
        %v571 = vsel %vm567, %v551, %v554
        %v572 = vsel %vm570, %v560, 2102212464
        %v573 = vsel %vm569, %v557, %v572
        %v574 = vsel %vm568, %v571, %v573
        %v575 = vsel %vm567, %v554, %v557
        %v576 = vsel %vm570, %v563, 920167782
        %v577 = vsel %vm569, %v560, %v576
        %v578 = vsel %vm568, %v575, %v577
        %v579 = vsel %vm567, %v557, %v560
        %v580 = vsel %vm570, %v566, 1326507024
        %v581 = vsel %vm569, %v563, %v580
        %v582 = vsel %vm568, %v579, %v581
        %v583 = vshll.u32 %v543, 8
        %v584 = vmul.u32.u64.compose %v583, %v582
        %v585 = vextract.low.u32 %v584
        %v586 = vextract.high.u32 %v584
        %v587 = vmul.u32.u64.compose %v583, %v578
        %v588 = vextract.low.u32 %v587
        %v589 = vextract.high.u32 %v587
        %v590 = vmul.u32 %v583, %v574
        %v591 = vadd.s32 %v586, %v588
        %vm592 = vc.u32 %v586, %v588
        %v593 = vadd.s32 %v589, 1
        %v594 = vsel %vm592, %v593, %v589
        %v595 = vadd.s32 %v590, %v594
        %v596 = vadd.s32 %v595, 536870912
        %v597 = vshrl.u32 %v596, 30
        %v598 = vshll.u32 %v597, 30
        %v599 = vsub.s32 %v595, %v598
        %vm600 = vcmp.lt.s32.totalorder %v599, 0
        %v601 = vsub.s32 0, %v599
        %v602 = vsel %vm600, %v601, %v599
        %v603 = vclz %v602
        %v604 = vsub.s32 %v603, 2
        %vm605 = vcmp.gt.s32.totalorder 0, %v604
        %v606 = vsel %vm605, 0, %v604
        %v607 = vsub.s32 32, %v606
        %v608 = vshll.u32 %v599, %v606
        %v609 = vshrl.u32 %v591, %v607
        %v610 = vor.u32 %v608, %v609
        %v611 = vsub.s32 4294967266, %v606
        %v612 = vadd.s32 %v611, 127
        %v613 = vshll.u32 %v612, 23
        %v614 = vor.u32 4788187, %v613
        %v615 = vand.u32 2147483647, %v614
        %v617 = vcvt.s32.f32 %v610
        %v618 = vmul.f32 %v617, %v615
        %v619 = vxor.u32 %v618, 2147483648
        %v620 = vsel %vm537, %v619, %v618
        %v621 = vsub.s32 4, %v597
        %v622 = vsel %vm537, %v621, %v597
        %v623 = vsel %vm536, %v115, %v620
        %v624 = vsel %vm536, 0, %v622
        %v625 = vcosq.f32.pop %v623
        %v626 = vsinq.f32.pop %v623
        %vm627 = vweird.f32 %v115
        %v628 = vand.u32 %v624, 3
        %vm629 = vcmp.lt.s32.totalorder %v628, 2
        %vm630 = vcmp.eq.s32.totalorder %v628, 0
        %v631 = vxor.u32 %v626, 2147483648
        %v632 = vsel %vm630, %v625, %v631
        %vm633 = vcmp.eq.s32.totalorder %v628, 2
        %v634 = vxor.u32 %v625, 2147483648
        %v635 = vsel %vm633, %v634, %v626
        %v636 = vsel %vm629, %v632, %v635
        %v637 = vsel %vm627, nan, %v636
        %v638 = vand.u32 2147483647, %v116
        %vm639 = vcmp.le.f32.partialorder %v638, 0.7853982
        %vm640 = vcmp.lt.s32.totalorder %v116, 0
        %v641 = vand.u32 %v116, 2139095040
        %v642 = vshrl.u32 %v641, 23
        %v643 = vsub.s32 %v642, 127
        %v644 = vand.u32 2147483647, %v116
        %v645 = vand.u32 %v644, 8388607
        %v646 = vor.u32 %v645, 8388608
        %v647 = vsub.s32 0, %v646
        %v648 = vadd.s32 %v643, 1
        %vm649 = vcmp.gt.s32.totalorder %v648, 0
        %v650 = vsel %vm649, %v648, 0
        %v651 = vshrl.u32 %v650, 5
        %v652 = vand.u32 %v650, 31
        %v653 = vsub.s32 32, %v652
        %v654 = vshrl.u32 683565275, %v653
        %v655 = vshll.u32 683565275, %v652
        %v656 = vshrl.u32 2475754826, %v653
        %v657 = vor.u32 %v655, %v656
        %v658 = vshll.u32 2475754826, %v652
        %v659 = vshrl.u32 2131351028, %v653
        %v660 = vor.u32 %v658, %v659
        %v661 = vshll.u32 2131351028, %v652
        %v662 = vshrl.u32 2102212464, %v653
        %v663 = vor.u32 %v661, %v662
        %v664 = vshll.u32 2102212464, %v652
        %v665 = vshrl.u32 920167782, %v653
        %v666 = vor.u32 %v664, %v665
        %v667 = vshll.u32 920167782, %v652
        %v668 = vshrl.u32 1326507024, %v653
        %v669 = vor.u32 %v667, %v668
        %vm670 = vcmp.lt.s32.totalorder %v651, 1
        %vm671 = vcmp.lt.s32.totalorder %v651, 2
        %vm672 = vcmp.lt.s32.totalorder %v651, 3
        %vm673 = vcmp.lt.s32.totalorder %v651, 4
        %v674 = vsel %vm670, %v654, %v657
        %v675 = vsel %vm673, %v663, 2102212464
        %v676 = vsel %vm672, %v660, %v675
        %v677 = vsel %vm671, %v674, %v676
        %v678 = vsel %vm670, %v657, %v660
        %v679 = vsel %vm673, %v666, 920167782
        %v680 = vsel %vm672, %v663, %v679
        %v681 = vsel %vm671, %v678, %v680
        %v682 = vsel %vm670, %v660, %v663
        %v683 = vsel %vm673, %v669, 1326507024
        %v684 = vsel %vm672, %v666, %v683
        %v685 = vsel %vm671, %v682, %v684
        %v686 = vshll.u32 %v646, 8
        %v687 = vmul.u32.u64.compose %v686, %v685
        %v688 = vextract.low.u32 %v687
        %v689 = vextract.high.u32 %v687
        %v690 = vmul.u32.u64.compose %v686, %v681
        %v691 = vextract.low.u32 %v690
        %v692 = vextract.high.u32 %v690
        %v693 = vmul.u32 %v686, %v677
        %v694 = vadd.s32 %v689, %v691
        %vm695 = vc.u32 %v689, %v691
        %v696 = vadd.s32 %v692, 1
        %v697 = vsel %vm695, %v696, %v692
        %v698 = vadd.s32 %v693, %v697
        %v699 = vadd.s32 %v698, 536870912
        %v700 = vshrl.u32 %v699, 30
        %v701 = vshll.u32 %v700, 30
        %v702 = vsub.s32 %v698, %v701
        %vm703 = vcmp.lt.s32.totalorder %v702, 0
        %v704 = vsub.s32 0, %v702
        %v705 = vsel %vm703, %v704, %v702
        %v706 = vclz %v705
        %v707 = vsub.s32 %v706, 2
        %vm708 = vcmp.gt.s32.totalorder 0, %v707
        %v709 = vsel %vm708, 0, %v707
        %v710 = vsub.s32 32, %v709
        %v711 = vshll.u32 %v702, %v709
        %v712 = vshrl.u32 %v694, %v710
        %v713 = vor.u32 %v711, %v712
        %v714 = vsub.s32 4294967266, %v709
        %v715 = vadd.s32 %v714, 127
        %v716 = vshll.u32 %v715, 23
        %v717 = vor.u32 4788187, %v716
        %v718 = vand.u32 2147483647, %v717
        %v720 = vcvt.s32.f32 %v713
        %v721 = vmul.f32 %v720, %v718
        %v722 = vxor.u32 %v721, 2147483648
        %v723 = vsel %vm640, %v722, %v721
        %v724 = vsub.s32 4, %v700
        %v725 = vsel %vm640, %v724, %v700
        %v726 = vsel %vm639, %v116, %v723
        %v727 = vsel %vm639, 0, %v725
        %v728 = vcosq.f32.pop %v726
        %v729 = vsinq.f32.pop %v726
        %vm730 = vweird.f32 %v116
        %v731 = vand.u32 %v727, 3
        %vm732 = vcmp.lt.s32.totalorder %v731, 2
        %vm733 = vcmp.eq.s32.totalorder %v731, 0
        %v734 = vxor.u32 %v729, 2147483648
        %v735 = vsel %vm733, %v728, %v734
        %vm736 = vcmp.eq.s32.totalorder %v731, 2
        %v737 = vxor.u32 %v728, 2147483648
        %v738 = vsel %vm736, %v737, %v729
        %v739 = vsel %vm732, %v735, %v738
        %v740 = vsel %vm730, nan, %v739
        %v741 = vand.u32 2147483647, %v117
        %vm742 = vcmp.le.f32.partialorder %v741, 0.7853982
        %vm743 = vcmp.lt.s32.totalorder %v117, 0
        %v744 = vand.u32 %v117, 2139095040
        %v745 = vshrl.u32 %v744, 23
        %v746 = vsub.s32 %v745, 127
        %v747 = vand.u32 2147483647, %v117
        %v748 = vand.u32 %v747, 8388607
        %v749 = vor.u32 %v748, 8388608
        %v750 = vsub.s32 0, %v749
        %v751 = vadd.s32 %v746, 1
        %vm752 = vcmp.gt.s32.totalorder %v751, 0
        %v753 = vsel %vm752, %v751, 0
        %v754 = vshrl.u32 %v753, 5
        %v755 = vand.u32 %v753, 31
        %v756 = vsub.s32 32, %v755
        %v757 = vshrl.u32 683565275, %v756
        %v758 = vshll.u32 683565275, %v755
        %v759 = vshrl.u32 2475754826, %v756
        %v760 = vor.u32 %v758, %v759
        %v761 = vshll.u32 2475754826, %v755
        %v762 = vshrl.u32 2131351028, %v756
        %v763 = vor.u32 %v761, %v762
        %v764 = vshll.u32 2131351028, %v755
        %v765 = vshrl.u32 2102212464, %v756
        %v766 = vor.u32 %v764, %v765
        %v767 = vshll.u32 2102212464, %v755
        %v768 = vshrl.u32 920167782, %v756
        %v769 = vor.u32 %v767, %v768
        %v770 = vshll.u32 920167782, %v755
        %v771 = vshrl.u32 1326507024, %v756
        %v772 = vor.u32 %v770, %v771
        %vm773 = vcmp.lt.s32.totalorder %v754, 1
        %vm774 = vcmp.lt.s32.totalorder %v754, 2
        %vm775 = vcmp.lt.s32.totalorder %v754, 3
        %vm776 = vcmp.lt.s32.totalorder %v754, 4
        %v777 = vsel %vm773, %v757, %v760
        %v778 = vsel %vm776, %v766, 2102212464
        %v779 = vsel %vm775, %v763, %v778
        %v780 = vsel %vm774, %v777, %v779
        %v781 = vsel %vm773, %v760, %v763
        %v782 = vsel %vm776, %v769, 920167782
        %v783 = vsel %vm775, %v766, %v782
        %v784 = vsel %vm774, %v781, %v783
        %v785 = vsel %vm773, %v763, %v766
        %v786 = vsel %vm776, %v772, 1326507024
        %v787 = vsel %vm775, %v769, %v786
        %v788 = vsel %vm774, %v785, %v787
        %v789 = vshll.u32 %v749, 8
        %v790 = vmul.u32.u64.compose %v789, %v788
        %v791 = vextract.low.u32 %v790
        %v792 = vextract.high.u32 %v790
        %v793 = vmul.u32.u64.compose %v789, %v784
        %v794 = vextract.low.u32 %v793
        %v795 = vextract.high.u32 %v793
        %v796 = vmul.u32 %v789, %v780
        %v797 = vadd.s32 %v792, %v794
        %vm798 = vc.u32 %v792, %v794
        %v799 = vadd.s32 %v795, 1
        %v800 = vsel %vm798, %v799, %v795
        %v801 = vadd.s32 %v796, %v800
        %v802 = vadd.s32 %v801, 536870912
        %v803 = vshrl.u32 %v802, 30
        %v804 = vshll.u32 %v803, 30
        %v805 = vsub.s32 %v801, %v804
        %vm806 = vcmp.lt.s32.totalorder %v805, 0
        %v807 = vsub.s32 0, %v805
        %v808 = vsel %vm806, %v807, %v805
        %v809 = vclz %v808
        %v810 = vsub.s32 %v809, 2
        %vm811 = vcmp.gt.s32.totalorder 0, %v810
        %v812 = vsel %vm811, 0, %v810
        %v813 = vsub.s32 32, %v812
        %v814 = vshll.u32 %v805, %v812
        %v815 = vshrl.u32 %v797, %v813
        %v816 = vor.u32 %v814, %v815
        %v817 = vsub.s32 4294967266, %v812
        %v818 = vadd.s32 %v817, 127
        %v819 = vshll.u32 %v818, 23
        %v820 = vor.u32 4788187, %v819
        %v821 = vand.u32 2147483647, %v820
        %v823 = vcvt.s32.f32 %v816
        %v824 = vmul.f32 %v823, %v821
        %v825 = vxor.u32 %v824, 2147483648
        %v826 = vsel %vm743, %v825, %v824
        %v827 = vsub.s32 4, %v803
        %v828 = vsel %vm743, %v827, %v803
        %v829 = vsel %vm742, %v117, %v826
        %v830 = vsel %vm742, 0, %v828
        %v831 = vcosq.f32.pop %v829
        %v832 = vsinq.f32.pop %v829
        %vm833 = vweird.f32 %v117
        %v834 = vand.u32 %v830, 3
        %vm835 = vcmp.lt.s32.totalorder %v834, 2
        %vm836 = vcmp.eq.s32.totalorder %v834, 0
        %v837 = vxor.u32 %v832, 2147483648
        %v838 = vsel %vm836, %v831, %v837
        %vm839 = vcmp.eq.s32.totalorder %v834, 2
        %v840 = vxor.u32 %v831, 2147483648
        %v841 = vsel %vm839, %v840, %v832
        %v842 = vsel %vm835, %v838, %v841
        %v843 = vsel %vm833, nan, %v842
        %v844 = vand.u32 2147483647, %v118
        %vm845 = vcmp.le.f32.partialorder %v844, 0.7853982
        %vm846 = vcmp.lt.s32.totalorder %v118, 0
        %v847 = vand.u32 %v118, 2139095040
        %v848 = vshrl.u32 %v847, 23
        %v849 = vsub.s32 %v848, 127
        %v850 = vand.u32 2147483647, %v118
        %v851 = vand.u32 %v850, 8388607
        %v852 = vor.u32 %v851, 8388608
        %v853 = vsub.s32 0, %v852
        %v854 = vadd.s32 %v849, 1
        %vm855 = vcmp.gt.s32.totalorder %v854, 0
        %v856 = vsel %vm855, %v854, 0
        %v857 = vshrl.u32 %v856, 5
        %v858 = vand.u32 %v856, 31
        %v859 = vsub.s32 32, %v858
        %v860 = vshrl.u32 683565275, %v859
        %v861 = vshll.u32 683565275, %v858
        %v862 = vshrl.u32 2475754826, %v859
        %v863 = vor.u32 %v861, %v862
        %v864 = vshll.u32 2475754826, %v858
        %v865 = vshrl.u32 2131351028, %v859
        %v866 = vor.u32 %v864, %v865
        %v867 = vshll.u32 2131351028, %v858
        %v868 = vshrl.u32 2102212464, %v859
        %v869 = vor.u32 %v867, %v868
        %v870 = vshll.u32 2102212464, %v858
        %v871 = vshrl.u32 920167782, %v859
        %v872 = vor.u32 %v870, %v871
        %v873 = vshll.u32 920167782, %v858
        %v874 = vshrl.u32 1326507024, %v859
        %v875 = vor.u32 %v873, %v874
        %vm876 = vcmp.lt.s32.totalorder %v857, 1
        %vm877 = vcmp.lt.s32.totalorder %v857, 2
        %vm878 = vcmp.lt.s32.totalorder %v857, 3
        %vm879 = vcmp.lt.s32.totalorder %v857, 4
        %v880 = vsel %vm876, %v860, %v863
        %v881 = vsel %vm879, %v869, 2102212464
        %v882 = vsel %vm878, %v866, %v881
        %v883 = vsel %vm877, %v880, %v882
        %v884 = vsel %vm876, %v863, %v866
        %v885 = vsel %vm879, %v872, 920167782
        %v886 = vsel %vm878, %v869, %v885
        %v887 = vsel %vm877, %v884, %v886
        %v888 = vsel %vm876, %v866, %v869
        %v889 = vsel %vm879, %v875, 1326507024
        %v890 = vsel %vm878, %v872, %v889
        %v891 = vsel %vm877, %v888, %v890
        %v892 = vshll.u32 %v852, 8
        %v893 = vmul.u32.u64.compose %v892, %v891
        %v894 = vextract.low.u32 %v893
        %v895 = vextract.high.u32 %v893
        %v896 = vmul.u32.u64.compose %v892, %v887
        %v897 = vextract.low.u32 %v896
        %v898 = vextract.high.u32 %v896
        %v899 = vmul.u32 %v892, %v883
        %v900 = vadd.s32 %v895, %v897
        %vm901 = vc.u32 %v895, %v897
        %v902 = vadd.s32 %v898, 1
        %v903 = vsel %vm901, %v902, %v898
        %v904 = vadd.s32 %v899, %v903
        %v905 = vadd.s32 %v904, 536870912
        %v906 = vshrl.u32 %v905, 30
        %v907 = vshll.u32 %v906, 30
        %v908 = vsub.s32 %v904, %v907
        %vm909 = vcmp.lt.s32.totalorder %v908, 0
        %v910 = vsub.s32 0, %v908
        %v911 = vsel %vm909, %v910, %v908
        %v912 = vclz %v911
        %v913 = vsub.s32 %v912, 2
        %vm914 = vcmp.gt.s32.totalorder 0, %v913
        %v915 = vsel %vm914, 0, %v913
        %v916 = vsub.s32 32, %v915
        %v917 = vshll.u32 %v908, %v915
        %v918 = vshrl.u32 %v900, %v916
        %v919 = vor.u32 %v917, %v918
        %v920 = vsub.s32 4294967266, %v915
        %v921 = vadd.s32 %v920, 127
        %v922 = vshll.u32 %v921, 23
        %v923 = vor.u32 4788187, %v922
        %v924 = vand.u32 2147483647, %v923
        %v926 = vcvt.s32.f32 %v919
        %v927 = vmul.f32 %v926, %v924
        %v928 = vxor.u32 %v927, 2147483648
        %v929 = vsel %vm846, %v928, %v927
        %v930 = vsub.s32 4, %v906
        %v931 = vsel %vm846, %v930, %v906
        %v932 = vsel %vm845, %v118, %v929
        %v933 = vsel %vm845, 0, %v931
        %v934 = vcosq.f32.pop %v932
        %v935 = vsinq.f32.pop %v932
        %vm936 = vweird.f32 %v118
        %v937 = vand.u32 %v933, 3
        %vm938 = vcmp.lt.s32.totalorder %v937, 2
        %vm939 = vcmp.eq.s32.totalorder %v937, 0
        %v940 = vxor.u32 %v935, 2147483648
        %v941 = vsel %vm939, %v934, %v940
        %vm942 = vcmp.eq.s32.totalorder %v937, 2
        %v943 = vxor.u32 %v934, 2147483648
        %v944 = vsel %vm942, %v943, %v935
        %v945 = vsel %vm938, %v941, %v944
        %v946 = vsel %vm936, nan, %v945
        %947 = vst [vmem:[%s105] sm:$0xff] %v222
        %948 = vst [vmem:[%s105 + $0x8] sm:$0xff] %v326
        %949 = vst [vmem:[%s105 + $0x10] sm:$0xff] %v430
        %950 = vst [vmem:[%s105 + $0x18] sm:$0xff] %v534
        %s951 = scalar_lea.vmem %s105, 96 [#allocation2]
        %952 = vst [vmem:[%s951] sm:$0xff] %v637
        %953 = vst [vmem:[%s951 + $0x8] sm:$0xff] %v740
        %954 = vst [vmem:[%s951 + $0x10] sm:$0xff] %v843
        %955 = vst [vmem:[%s951 + $0x18] sm:$0xff] %v946
        %v956 = vmul.f32 %v222, 2.0
        %v957 = vmul.f32 %v326, 2.0
        %v958 = vmul.f32 %v430, 2.0
        %v959 = vmul.f32 %v534, 2.0
        %v960 = vmul.f32 %v956, %v637
        %v961 = vmul.f32 %v957, %v740
        %v962 = vmul.f32 %v958, %v843
        %v963 = vmul.f32 %v959, %v946
        %v964 = vmul.f32 %v222, %v222
        %v965 = vmul.f32 %v326, %v326
        %v966 = vmul.f32 %v430, %v430
        %v967 = vmul.f32 %v534, %v534
        %v968 = vmul.f32 %v964, 2.0
        %v969 = vmul.f32 %v965, 2.0
        %v970 = vmul.f32 %v966, 2.0
        %v971 = vmul.f32 %v967, 2.0
        %v972 = vsub.f32 1.0, %v968
        %v973 = vsub.f32 1.0, %v969
        %v974 = vsub.f32 1.0, %v970
        %v975 = vsub.f32 1.0, %v971
        %s976 = scalar_lea.vmem %s105, 32 [#allocation2]
        %977 = vst [vmem:[%s976] sm:$0xff] %v960
        %978 = vst [vmem:[%s976 + $0x8] sm:$0xff] %v961
        %979 = vst [vmem:[%s976 + $0x10] sm:$0xff] %v962
        %980 = vst [vmem:[%s976 + $0x18] sm:$0xff] %v963
        %s981 = scalar_lea.vmem %s105, 128 [#allocation2]
        %982 = vst [vmem:[%s981] sm:$0xff] %v972
        %983 = vst [vmem:[%s981 + $0x8] sm:$0xff] %v973
        %984 = vst [vmem:[%s981 + $0x10] sm:$0xff] %v974
        %985 = vst [vmem:[%s981 + $0x18] sm:$0xff] %v975
        %v986 = vmul.f32 %v960, 2.0
        %v987 = vmul.f32 %v961, 2.0
        %v988 = vmul.f32 %v962, 2.0
        %v989 = vmul.f32 %v963, 2.0
        %v990 = vmul.f32 %v986, %v972
        %v991 = vmul.f32 %v987, %v973
        %v992 = vmul.f32 %v988, %v974
        %v993 = vmul.f32 %v989, %v975
        %v994 = vmul.f32 %v960, %v960
        %v995 = vmul.f32 %v961, %v961
        %v996 = vmul.f32 %v962, %v962
        %v997 = vmul.f32 %v963, %v963
        %v998 = vmul.f32 %v994, 2.0
        %v999 = vmul.f32 %v995, 2.0
        %v1000 = vmul.f32 %v996, 2.0
        %v1001 = vmul.f32 %v997, 2.0
        %v1002 = vsub.f32 1.0, %v998
        %v1003 = vsub.f32 1.0, %v999
        %v1004 = vsub.f32 1.0, %v1000
        %v1005 = vsub.f32 1.0, %v1001
        %s1006 = scalar_lea.vmem %s105, 64 [#allocation2]
        %1007 = vst [vmem:[%s1006] sm:$0xff] %v990
        %1008 = vst [vmem:[%s1006 + $0x8] sm:$0xff] %v991
        %1009 = vst [vmem:[%s1006 + $0x10] sm:$0xff] %v992
        %1010 = vst [vmem:[%s1006 + $0x18] sm:$0xff] %v993
        %s1011 = scalar_lea.vmem %s105, 160 [#allocation2]
        %1012 = vst [vmem:[%s1011] sm:$0xff] %v1002
        %1013 = vst [vmem:[%s1011 + $0x8] sm:$0xff] %v1003
        %1014 = vst [vmem:[%s1011 + $0x10] sm:$0xff] %v1004
        %1015 = vst [vmem:[%s1011 + $0x18] sm:$0xff] %v1005
        %s1016 = sand.u32 %s46, 1
        %s1017 = sand.u32 %s46, 1
        %s1018 = smul.addr %s1017, 192
        %s1019 = scalar_lea.vmem [#allocation2], %s1018
        // Predicated region
        $region25: #{_lambda_.1} parent=23 // pred_check
          %p1020 = pneg %p56
        $region26: #{_lambda_.1} parent=23 // pred_check_branch
          %1022 = sbr.rel (%p1020) target = $region28
        $region27: #{_lambda_.1} parent=23 // pred_region
          %s1023 = smul.addr %s12, 4
          %s1024 = smul.addr %s1023, 8
          %s1025 = scalar_lea.vmem %s1, %s1024
          // Predicated region
          $region29: #{_lambda_.1} parent=27 // pred_check
            _
          $region30: #{_lambda_.1} parent=27 // pred_check_branch
            %1027 = sbr.rel (0) target = $region32
          $region31: #{_lambda_.1} parent=27 // pred_region
            // Predicated region
            $region33: #{_lambda_.1} parent=31 // pred_check
              _
            $region34: #{_lambda_.1} parent=31 // pred_check_branch
              %1029 = sbr.rel (0) target = $region36
            $region35: #{_lambda_.1} parent=31 // pred_region
              loop: start=0, step=1, limit=1
              $region37: #{_lambda_.1} parent=35 // loop_pre_header
                _
              $region38: #{_lambda_.1} parent=35 // loop_header
                %s1031 = sphi 0, %s1035
                %p1032 = scmp.ge.s32.totalorder %s1031, 1
                %s1036 = sphi %s1019, %s1019
                %s1037 = sphi %s1025, %s1025
              $region39: #{_lambda_.1} parent=35 // loop_header_branch
                %1034 = sbr.rel (%p1032) target = $region43
              $region40: #{_lambda_.1} parent=35 // loop_body
                %v1038 = vld [vmem:[%s1036] sm:$0xff]
                %1039 = vst [vmem:[%s1037] sm:$0xff] %v1038
                %v1040 = vld [vmem:[%s1036 + $0x8] sm:$0xff]
                %1041 = vst [vmem:[%s1037 + $0x8] sm:$0xff] %v1040
                %v1042 = vld [vmem:[%s1036 + $0x10] sm:$0xff]
                %1043 = vst [vmem:[%s1037 + $0x10] sm:$0xff] %v1042
                %v1044 = vld [vmem:[%s1036 + $0x18] sm:$0xff]
                %1045 = vst [vmem:[%s1037 + $0x18] sm:$0xff] %v1044
                %v1046 = vld [vmem:[%s1036 + $0x20] sm:$0xff]
                %1047 = vst [vmem:[%s1037 + $0x100] sm:$0xff] %v1046
                %v1048 = vld [vmem:[%s1036 + $0x28] sm:$0xff]
                %1049 = vst [vmem:[%s1037 + $0x108] sm:$0xff] %v1048
                %v1050 = vld [vmem:[%s1036 + $0x30] sm:$0xff]
                %1051 = vst [vmem:[%s1037 + $0x110] sm:$0xff] %v1050
                %v1052 = vld [vmem:[%s1036 + $0x38] sm:$0xff]
                %1053 = vst [vmem:[%s1037 + $0x118] sm:$0xff] %v1052
                %v1054 = vld [vmem:[%s1036 + $0x40] sm:$0xff]
                %1055 = vst [vmem:[%s1037 + $0x200] sm:$0xff] %v1054
                %v1056 = vld [vmem:[%s1036 + $0x48] sm:$0xff]
                %1057 = vst [vmem:[%s1037 + $0x208] sm:$0xff] %v1056
                %v1058 = vld [vmem:[%s1036 + $0x50] sm:$0xff]
                %1059 = vst [vmem:[%s1037 + $0x210] sm:$0xff] %v1058
                %v1060 = vld [vmem:[%s1036 + $0x58] sm:$0xff]
                %1061 = vst [vmem:[%s1037 + $0x218] sm:$0xff] %v1060
                %v1062 = vld [vmem:[%s1036 + $0x60] sm:$0xff]
                %1063 = vst [vmem:[%s1037 + $0x300] sm:$0xff] %v1062
                %v1064 = vld [vmem:[%s1036 + $0x68] sm:$0xff]
                %1065 = vst [vmem:[%s1037 + $0x308] sm:$0xff] %v1064
                %v1066 = vld [vmem:[%s1036 + $0x70] sm:$0xff]
                %1067 = vst [vmem:[%s1037 + $0x310] sm:$0xff] %v1066
                %v1068 = vld [vmem:[%s1036 + $0x78] sm:$0xff]
                %1069 = vst [vmem:[%s1037 + $0x318] sm:$0xff] %v1068
                %v1070 = vld [vmem:[%s1036 + $0x80] sm:$0xff]
                %1071 = vst [vmem:[%s1037 + $0x400] sm:$0xff] %v1070
                %v1072 = vld [vmem:[%s1036 + $0x88] sm:$0xff]
                %1073 = vst [vmem:[%s1037 + $0x408] sm:$0xff] %v1072
                %v1074 = vld [vmem:[%s1036 + $0x90] sm:$0xff]
                %1075 = vst [vmem:[%s1037 + $0x410] sm:$0xff] %v1074
                %v1076 = vld [vmem:[%s1036 + $0x98] sm:$0xff]
                %1077 = vst [vmem:[%s1037 + $0x418] sm:$0xff] %v1076
                %v1078 = vld [vmem:[%s1036 + $0xa0] sm:$0xff]
                %1079 = vst [vmem:[%s1037 + $0x500] sm:$0xff] %v1078
                %v1080 = vld [vmem:[%s1036 + $0xa8] sm:$0xff]
                %1081 = vst [vmem:[%s1037 + $0x508] sm:$0xff] %v1080
                %v1082 = vld [vmem:[%s1036 + $0xb0] sm:$0xff]
                %1083 = vst [vmem:[%s1037 + $0x510] sm:$0xff] %v1082
                %v1084 = vld [vmem:[%s1036 + $0xb8] sm:$0xff]
                %1085 = vst [vmem:[%s1037 + $0x518] sm:$0xff] %v1084
              $region41: #{_lambda_.1} parent=35 // loop_footer
                %s1035 = sadd.s32 1, %s1031
              $region42: #{_lambda_.1} parent=35 // loop_footer_branch
                %1030 = sbr.rel target = $region38
              $region43: #{_lambda_.1} parent=35 // loop_exit
                _
            $region36: #{_lambda_.1} parent=31 // pred_fallthru
              _
            // Predicated region
            $region44: #{_lambda_.1} parent=31 // pred_check
              _
            $region45: #{_lambda_.1} parent=31 // pred_check_branch
              %1087 = sbr.rel target = $region47
            $region46: #{_lambda_.1} parent=31 // pred_region
              _
            $region47: #{_lambda_.1} parent=31 // pred_fallthru
              _
          $region32: #{_lambda_.1} parent=27 // pred_fallthru
            _
          %1088 = vnop
        $region28: #{_lambda_.1} parent=23 // pred_fallthru
          _
      $region24: #{_lambda_.1} parent=5 // pred_fallthru
        _
      %p1089 = scmp.le.s32.totalorder 2, %s7
      // Predicated region
      $region48: #{_lambda_.1} parent=5 // pred_check
        %p1090 = pneg %p1089
      $region49: #{_lambda_.1} parent=5 // pred_check_branch
        %1092 = sbr.rel (%p1090) target = $region51
      $region50: #{_lambda_.1} parent=5 // pred_region
        %s1093 = ssub.s32 %s7, 2
        // Predicated region
        $region52: #{_lambda_.1} parent=50 // pred_check
          %p1094 = pneg %p62
        $region53: #{_lambda_.1} parent=50 // pred_check_branch
          %1096 = sbr.rel (%p1094) target = $region55
        $region54: #{_lambda_.1} parent=50 // pred_region
          %s1097 = sand.u32 %s47, 1
          %s1098 = sand.u32 %s47, 1
          %s1099 = smul.addr %s1098, 192
          %s1100 = scalar_lea.vmem [#allocation2], %s1099
        $region55: #{_lambda_.1} parent=50 // pred_fallthru
          _
      $region51: #{_lambda_.1} parent=5 // pred_fallthru
        _
    $region6: #{_lambda_.1} parent=1 // loop_footer
      %s11 = sadd.s32 1, %s7
    $region7: #{_lambda_.1} parent=1 // loop_footer_branch
      %6 = sbr.rel target = $region3
    $region8: #{_lambda_.1} parent=1 // loop_exit
      _

</llo_original>
